<compile_context>
chip_gen: v7x
topology: tpu7x:2x2x1
jax: 0.10.0
libtpu: 0.0.40
codegen_flags: <defaults>
</compile_context>

<pallas_src>
import jax
import jax.numpy as jnp
from jax.experimental import pallas as pl
from jax.experimental.pallas import tpu as pltpu


def st_net_exp_kernel(rw_ref, x_ref, w1_ref, b1_ref,
                      w2s_ref, b2s_ref, w2t_ref, b2t_ref,
                      s_ref, t_ref):
    """Fused: linear1 -> tanh -> (linear2_s, linear2_t) -> exp(rw)*tanh(s)."""
    # Linear 1: bf16 MXU matmul with f32 accumulation; bias + tanh in f32.
    h = jnp.dot(x_ref[...], w1_ref[...], preferred_element_type=jnp.float32)
    h = jnp.tanh(h + b1_ref[...])
    h_lo = h.astype(jnp.bfloat16)          # feed the MXU in bf16 again

    # Linear 2, split into s / t halves in the wrapper -> no in-kernel
    # lane-boundary slicing of a fused (tb, 2*output_dim) result.
    s = jnp.dot(h_lo, w2s_ref[...], preferred_element_type=jnp.float32) + b2s_ref[...]
    t = jnp.dot(h_lo, w2t_ref[...], preferred_element_type=jnp.float32) + b2t_ref[...]

    # Rescale: exp(weight) * tanh(s).  weight is a (1,1) f32 VMEM block; exp
    # on the EUP, then a sublane/lane broadcast multiply on the VPU.
    scale = jnp.exp(rw_ref[...])                     # (1, 1) f32
    s_ref[...] = (scale * jnp.tanh(s)).astype(s_ref.dtype)
    t_ref[...] = t.astype(t_ref.dtype)


def st_net_exp_forward(x, w1, b1, w2, b2, rescale_w, *, output_dim, tb=None):
    """x: (B, input_dim); w1: (input_dim, hid); w2: (hid, 2*output_dim)."""
    B, input_dim = x.shape
    hid_dim = w1.shape[1]
    assert w2.shape == (hid_dim, 2 * output_dim)

    # Batch tile: whole batch when small (block == full dim satisfies the
    # (8,128) rule), else 512 rows with zero-padding of the batch.
    if tb is None:
        tb = B if B <= 512 else 512
    b_pad = ((B + tb - 1) // tb) * tb
    x_in = x if b_pad == B else jnp.pad(x, ((0, b_pad - B), (0, 0)))
    grid = (b_pad // tb,)

    # bf16 for everything the MXU consumes; f32 for biases / scalar.
    x_lo = x_in.astype(jnp.bfloat16)
    w1_lo = w1.astype(jnp.bfloat16)
    w2s = w2[:, :output_dim].astype(jnp.bfloat16)
    w2t = w2[:, output_dim:].astype(jnp.bfloat16)
    b1_r = b1.reshape(1, hid_dim).astype(jnp.float32)
    b2s = b2[:output_dim].reshape(1, output_dim).astype(jnp.float32)
    b2t = b2[output_dim:].reshape(1, output_dim).astype(jnp.float32)
    rw = rescale_w.reshape(1, 1).astype(jnp.float32)

    # Advisory cost for XLA scheduling around the custom call.
    flops = 2 * b_pad * (input_dim * hid_dim + hid_dim * 2 * output_dim)
    transcendentals = b_pad * (hid_dim + output_dim) + 1
    bytes_accessed = (
        x_lo.size * 2 + w1_lo.size * 2 + w2s.size * 2 + w2t.size * 2
        + (b1_r.size + b2s.size + b2t.size + rw.size) * 4
        + 2 * b_pad * output_dim * 4)
    cost = pl.CostEstimate(flops=flops, transcendentals=transcendentals,
                           bytes_accessed=bytes_accessed)

    # Explicit VMEM budget: BlockSpec double-buffers the batch-tiled arrays,
    # so count generously and clamp well under v7x's 64 MiB physical VMEM.
    per_step_bytes = (
        tb * input_dim * 2                                   # x tile (bf16)
        + (w1_lo.size + w2s.size + w2t.size) * 2             # weights (bf16)
        + (b1_r.size + b2s.size + b2t.size + rw.size) * 4    # biases (f32)
        + 2 * tb * output_dim * 4                            # s, t tiles (f32)
    )
    vmem_limit = int(min(max(4 * per_step_bytes, 32 * 1024 * 1024),
                         48 * 1024 * 1024))

    s, t = pl.pallas_call(
        st_net_exp_kernel,
        out_shape=(
            jax.ShapeDtypeStruct((b_pad, output_dim), jnp.float32),
            jax.ShapeDtypeStruct((b_pad, output_dim), jnp.float32),
        ),
        grid=grid,
        in_specs=[
            # rescale weight: (1,1) f32 block, resident for every grid step
            pl.BlockSpec((1, 1), lambda i: (0, 0)),
            # x: tiled over batch (lane axis = features, full extent)
            pl.BlockSpec((tb, input_dim), lambda i: (i, 0)),
            # weights / biases: full blocks, identical block index each step
            pl.BlockSpec((input_dim, hid_dim), lambda i: (0, 0)),
            pl.BlockSpec((1, hid_dim), lambda i: (0, 0)),
            pl.BlockSpec((hid_dim, output_dim), lambda i: (0, 0)),
            pl.BlockSpec((1, output_dim), lambda i: (0, 0)),
            pl.BlockSpec((hid_dim, output_dim), lambda i: (0, 0)),
            pl.BlockSpec((1, output_dim), lambda i: (0, 0)),
        ],
        out_specs=(
            pl.BlockSpec((tb, output_dim), lambda i: (i, 0)),
            pl.BlockSpec((tb, output_dim), lambda i: (i, 0)),
        ),
        compiler_params=pltpu.CompilerParams(
            dimension_semantics=("parallel",),
            vmem_limit_bytes=vmem_limit),
        cost_estimate=cost,
    )(rw, x_lo, w1_lo, b1_r, w2s, b2s, w2t, b2t)

    if b_pad != B:
        s = s[:B]
        t = t[:B]
    return s, t


def init_params(key, input_dim, hid_dim, output_dim):
    """Parameter init mirroring ST_Net_Exp.reset_parameters()."""
    bound = (6.0 / (input_dim + hid_dim)) ** 0.5
    w1_t = jax.random.uniform(key, (hid_dim, input_dim),
                              minval=-bound, maxval=bound, dtype=jnp.float32)
    w1 = w1_t.T                                    # (input_dim, hid_dim) for x @ W
    b1 = jnp.zeros((hid_dim,), jnp.float32)
    w2 = jnp.full((hid_dim, 2 * output_dim), 1e-10, jnp.float32)
    b2 = jnp.zeros((2 * output_dim,), jnp.float32)
    rescale_w = jnp.zeros((1,), jnp.float32)
    return w1, b1, w2, b2, rescale_w


if __name__ == "__main__":
    B, input_dim, hid_dim, output_dim = 16, 16, 32, 8

    key = jax.random.PRNGKey(0)
    kx, k1, k2, k3, k4 = jax.random.split(key, 5)
    x = jax.random.normal(kx, (B, input_dim), dtype=jnp.float32)

    # Random (non-degenerate) parameters so the numerical check is meaningful;
    # init_params() above reproduces the PyTorch reset_parameters() init.
    w1 = jax.random.normal(k1, (input_dim, hid_dim), dtype=jnp.float32) * 0.3
    b1 = jax.random.normal(k2, (hid_dim,), dtype=jnp.float32) * 0.1
    w2 = jax.random.normal(k3, (hid_dim, 2 * output_dim), dtype=jnp.float32) * 0.3
    b2 = jax.random.normal(k4, (2 * output_dim,), dtype=jnp.float32) * 0.1
    rescale_w = jnp.array([0.25], jnp.float32)

    s, t = st_net_exp_forward(x, w1, b1, w2, b2, rescale_w,
                              output_dim=output_dim)
    jax.block_until_ready((s, t))

    # Pure-JAX reference mirroring the kernel's bf16-MXU / f32-accumulate path.
    x_lo = x.astype(jnp.bfloat16)
    w1_lo = w1.astype(jnp.bfloat16)
    w2_lo = w2.astype(jnp.bfloat16)
    h_ref = jnp.tanh(
        jnp.dot(x_lo, w1_lo, preferred_element_type=jnp.float32) + b1)
    y_ref = jnp.dot(h_ref.astype(jnp.bfloat16), w2_lo,
                    preferred_element_type=jnp.float32) + b2
    s_ref = jnp.exp(rescale_w[0]) * jnp.tanh(y_ref[:, :output_dim])
    t_ref = y_ref[:, output_dim:]
    assert jnp.allclose(s, s_ref, atol=1e-2, rtol=2e-2), "s mismatch (bf16 ref)"
    assert jnp.allclose(t, t_ref, atol=1e-2, rtol=2e-2), "t mismatch (bf16 ref)"

    # Sanity vs. full-f32 reference (loose tolerance: bf16 MXU inputs).
    h32 = jnp.tanh(x @ w1 + b1)
    y32 = h32 @ w2 + b2
    assert jnp.allclose(s, jnp.exp(rescale_w[0]) * jnp.tanh(y32[:, :output_dim]),
                        atol=5e-2, rtol=5e-2), "s mismatch (f32 ref)"
    assert jnp.allclose(t, y32[:, output_dim:], atol=5e-2, rtol=5e-2), \
        "t mismatch (f32 ref)"

    print("KERNEL_OK")
</pallas_src>

<mosaic_0001>
module attributes {stable_mosaic.version = 11 : i64} {
  func.func @st_net_exp_kernel(%arg0: i32, %arg1: memref<1x1xf32, #tpu.memory_space<vmem>>, %arg2: memref<16x16xbf16, #tpu.memory_space<vmem>>, %arg3: memref<16x32xbf16, #tpu.memory_space<vmem>>, %arg4: memref<1x32xf32, #tpu.memory_space<vmem>>, %arg5: memref<32x8xbf16, #tpu.memory_space<vmem>>, %arg6: memref<1x8xf32, #tpu.memory_space<vmem>>, %arg7: memref<32x8xbf16, #tpu.memory_space<vmem>>, %arg8: memref<1x8xf32, #tpu.memory_space<vmem>>, %arg9: memref<16x8xf32, #tpu.memory_space<vmem>>, %arg10: memref<16x8xf32, #tpu.memory_space<vmem>>) attributes {dimension_semantics = [#tpu.dimension_semantics<parallel>], iteration_bounds = array<i64: 1>, scalar_prefetch = 0 : i64, scratch_operands = 0 : i64, tpu.core_type = #tpu.core_type<tc>, window_params = [{pipeline_mode = #tpu.pipeline_mode<synchronous>, transform_indices = @transform_0, window_bounds = array<i64: 1, 1>}, {transform_indices = @transform_1, window_bounds = array<i64: 16, 16>}, {pipeline_mode = #tpu.pipeline_mode<synchronous>, transform_indices = @transform_2, window_bounds = array<i64: 16, 32>}, {pipeline_mode = #tpu.pipeline_mode<synchronous>, transform_indices = @transform_3, window_bounds = array<i64: 1, 32>}, {pipeline_mode = #tpu.pipeline_mode<synchronous>, transform_indices = @transform_4, window_bounds = array<i64: 32, 8>}, {pipeline_mode = #tpu.pipeline_mode<synchronous>, transform_indices = @transform_5, window_bounds = array<i64: 1, 8>}, {pipeline_mode = #tpu.pipeline_mode<synchronous>, transform_indices = @transform_6, window_bounds = array<i64: 32, 8>}, {pipeline_mode = #tpu.pipeline_mode<synchronous>, transform_indices = @transform_7, window_bounds = array<i64: 1, 8>}, {transform_indices = @transform_8, window_bounds = array<i64: 16, 8>}, {transform_indices = @transform_9, window_bounds = array<i64: 16, 8>}]} {
    %c0 = arith.constant 0 : index
    %c0_0 = arith.constant 0 : index
    %0 = vector.load %arg2[%c0, %c0_0] : memref<16x16xbf16, #tpu.memory_space<vmem>>, vector<16x16xbf16>
    %c0_1 = arith.constant 0 : index
    %c0_2 = arith.constant 0 : index
    %1 = vector.load %arg3[%c0_1, %c0_2] : memref<16x32xbf16, #tpu.memory_space<vmem>>, vector<16x32xbf16>
    %cst = arith.constant dense<0.000000e+00> : vector<16x32xf32>
    %2 = tpu.matmul %0, %1, %cst {dimension_numbers = #tpu.dot_dimension_numbers<[1], [0], [0], [1], [0, 0, 1, 1], [], []>} : vector<16x16xbf16>, vector<16x32xbf16>, vector<16x32xf32> -> vector<16x32xf32>
    %c0_3 = arith.constant 0 : index
    %c0_4 = arith.constant 0 : index
    %3 = vector.load %arg4[%c0_3, %c0_4] : memref<1x32xf32, #tpu.memory_space<vmem>>, vector<1x32xf32>
    %4 = vector.broadcast %3 : vector<1x32xf32> to vector<16x32xf32>
    %5 = arith.addf %2, %4 : vector<16x32xf32>
    %6 = math.tanh %5 : vector<16x32xf32>
    %7 = arith.truncf %6 : vector<16x32xf32> to vector<16x32xbf16>
    %c0_5 = arith.constant 0 : index
    %c0_6 = arith.constant 0 : index
    %8 = vector.load %arg5[%c0_5, %c0_6] : memref<32x8xbf16, #tpu.memory_space<vmem>>, vector<32x8xbf16>
    %cst_7 = arith.constant dense<0.000000e+00> : vector<16x8xf32>
    %9 = tpu.matmul %7, %8, %cst_7 {dimension_numbers = #tpu.dot_dimension_numbers<[1], [0], [0], [1], [0, 0, 1, 1], [], []>} : vector<16x32xbf16>, vector<32x8xbf16>, vector<16x8xf32> -> vector<16x8xf32>
    %c0_8 = arith.constant 0 : index
    %c0_9 = arith.constant 0 : index
    %10 = vector.load %arg6[%c0_8, %c0_9] : memref<1x8xf32, #tpu.memory_space<vmem>>, vector<1x8xf32>
    %11 = vector.broadcast %10 : vector<1x8xf32> to vector<16x8xf32>
    %12 = arith.addf %9, %11 : vector<16x8xf32>
    %c0_10 = arith.constant 0 : index
    %c0_11 = arith.constant 0 : index
    %13 = vector.load %arg7[%c0_10, %c0_11] : memref<32x8xbf16, #tpu.memory_space<vmem>>, vector<32x8xbf16>
    %cst_12 = arith.constant dense<0.000000e+00> : vector<16x8xf32>
    %14 = tpu.matmul %7, %13, %cst_12 {dimension_numbers = #tpu.dot_dimension_numbers<[1], [0], [0], [1], [0, 0, 1, 1], [], []>} : vector<16x32xbf16>, vector<32x8xbf16>, vector<16x8xf32> -> vector<16x8xf32>
    %c0_13 = arith.constant 0 : index
    %c0_14 = arith.constant 0 : index
    %15 = vector.load %arg8[%c0_13, %c0_14] : memref<1x8xf32, #tpu.memory_space<vmem>>, vector<1x8xf32>
    %16 = vector.broadcast %15 : vector<1x8xf32> to vector<16x8xf32>
    %17 = arith.addf %14, %16 : vector<16x8xf32>
    %c0_15 = arith.constant 0 : index
    %c0_16 = arith.constant 0 : index
    %18 = vector.load %arg1[%c0_15, %c0_16] : memref<1x1xf32, #tpu.memory_space<vmem>>, vector<1x1xf32>
    %19 = math.exp %18 : vector<1x1xf32>
    %20 = math.tanh %12 : vector<16x8xf32>
    %21 = vector.broadcast %19 : vector<1x1xf32> to vector<16x8xf32>
    %22 = arith.mulf %21, %20 : vector<16x8xf32>
    %c0_17 = arith.constant 0 : index
    %c0_18 = arith.constant 0 : index
    %23 = vector.load %arg9[%c0_17, %c0_18] : memref<16x8xf32, #tpu.memory_space<vmem>>, vector<16x8xf32>
    tpu.vector_store %arg9[%c0_17, %c0_18], %22 {strides = array<i32>} : memref<16x8xf32, #tpu.memory_space<vmem>>, vector<16x8xf32>,
    %c0_19 = arith.constant 0 : index
    %c0_20 = arith.constant 0 : index
    %24 = vector.load %arg10[%c0_19, %c0_20] : memref<16x8xf32, #tpu.memory_space<vmem>>, vector<16x8xf32>
    tpu.vector_store %arg10[%c0_19, %c0_20], %17 {strides = array<i32>} : memref<16x8xf32, #tpu.memory_space<vmem>>, vector<16x8xf32>,
    return
  }
  func.func @transform_0(%arg0: i32) -> (i32, i32) {
    %c0_i32 = arith.constant 0 : i32
    %c0_i32_0 = arith.constant 0 : i32
    %c0_i32_1 = arith.constant 0 : i32
    return %c0_i32, %c0_i32_0 : i32, i32
  }
  func.func @transform_1(%arg0: i32) -> (i32, i32) {
    %c0_i32 = arith.constant 0 : i32
    %c0_i32_0 = arith.constant 0 : i32
    return %arg0, %c0_i32 : i32, i32
  }
  func.func @transform_2(%arg0: i32) -> (i32, i32) {
    %c0_i32 = arith.constant 0 : i32
    %c0_i32_0 = arith.constant 0 : i32
    %c0_i32_1 = arith.constant 0 : i32
    return %c0_i32, %c0_i32_0 : i32, i32
  }
  func.func @transform_3(%arg0: i32) -> (i32, i32) {
    %c0_i32 = arith.constant 0 : i32
    %c0_i32_0 = arith.constant 0 : i32
    %c0_i32_1 = arith.constant 0 : i32
    return %c0_i32, %c0_i32_0 : i32, i32
  }
  func.func @transform_4(%arg0: i32) -> (i32, i32) {
    %c0_i32 = arith.constant 0 : i32
    %c0_i32_0 = arith.constant 0 : i32
    %c0_i32_1 = arith.constant 0 : i32
    return %c0_i32, %c0_i32_0 : i32, i32
  }
  func.func @transform_5(%arg0: i32) -> (i32, i32) {
    %c0_i32 = arith.constant 0 : i32
    %c0_i32_0 = arith.constant 0 : i32
    %c0_i32_1 = arith.constant 0 : i32
    return %c0_i32, %c0_i32_0 : i32, i32
  }
  func.func @transform_6(%arg0: i32) -> (i32, i32) {
    %c0_i32 = arith.constant 0 : i32
    %c0_i32_0 = arith.constant 0 : i32
    %c0_i32_1 = arith.constant 0 : i32
    return %c0_i32, %c0_i32_0 : i32, i32
  }
  func.func @transform_7(%arg0: i32) -> (i32, i32) {
    %c0_i32 = arith.constant 0 : i32
    %c0_i32_0 = arith.constant 0 : i32
    %c0_i32_1 = arith.constant 0 : i32
    return %c0_i32, %c0_i32_0 : i32, i32
  }
  func.func @transform_8(%arg0: i32) -> (i32, i32) {
    %c0_i32 = arith.constant 0 : i32
    %c0_i32_0 = arith.constant 0 : i32
    return %arg0, %c0_i32 : i32, i32
  }
  func.func @transform_9(%arg0: i32) -> (i32, i32) {
    %c0_i32 = arith.constant 0 : i32
    %c0_i32_0 = arith.constant 0 : i32
    return %arg0, %c0_i32 : i32, i32
  }
}

</mosaic_0001>

<llo_original>
// kernel: tpu_custom_call.1
$region0: #{tpu_custom_call.1}
  #allocation0 [shape = 'u32[]', space=smem, size = 0x4, offset = 0x4, fixed_abs, tag = 'smem constant byte address 0x4 - core index']
  #allocation1 [shape = 'u32[144,128]{1,0:T(1,128)}', space=vmem, size = 0x12000, scoped, tag = 'internal scratch']
  #allocation2 [shape = 'f32[1,1]{1,0:T(1,128)S(1)}', space=vmem, size = 0x200, scoped, tag = 'scoped memory for tpu_custom_call.1']
  %s0 = inlined_call_operand.<no memory space> [shape: f32[1,1], index: 0, kind: input, shape index: {}]
  %s1 = inlined_call_operand.vmem [shape: bf16[16,16], index: 1, kind: input, shape index: {}]
  %s2 = inlined_call_operand.vmem [shape: bf16[16,32], index: 2, kind: input, shape index: {}]
  %s3 = inlined_call_operand.vmem [shape: f32[1,32], index: 3, kind: input, shape index: {}]
  %s4 = inlined_call_operand.vmem [shape: bf16[32,8], index: 4, kind: input, shape index: {}]
  %s5 = inlined_call_operand.vmem [shape: f32[1,8], index: 5, kind: input, shape index: {}]
  %s6 = inlined_call_operand.vmem [shape: bf16[32,8], index: 6, kind: input, shape index: {}]
  %s7 = inlined_call_operand.vmem [shape: f32[1,8], index: 7, kind: input, shape index: {}]
  %s8 = inlined_call_operand.vmem [shape: f32[16,8], index: 8, kind: output, shape index: {0}]
  %s9 = inlined_call_operand.vmem [shape: f32[16,8], index: 9, kind: output, shape index: {1}]
  %10 = xla_tuple %s8, %s9
  %s11 = sld [smem:[#allocation0]]
  $region50: #{tpu_custom_call.1} parent=0
    _
  %s13 = ssub.s32 1, %s11
  %s14 = scalar_select 0, %s13, %s11
  %v15 = vstv %s0
  %16 = vst [vmem:[#allocation2] sm:$0x1] %v15
  // Predicated region
  $region2: #{tpu_custom_call.1} parent=0 // pred_check
    _
  $region3: #{tpu_custom_call.1} parent=0 // pred_check_branch
    %18 = sbr.rel (0) target = $region5
  $region4: #{tpu_custom_call.1} parent=0 // pred_region
    _
  $region5: #{tpu_custom_call.1} parent=0 // pred_fallthru
    _
  // Predicated region
  $region6: #{tpu_custom_call.1} parent=0 // pred_check
    _
  $region7: #{tpu_custom_call.1} parent=0 // pred_check_branch
    %20 = sbr.rel (0) target = $region9
  $region8: #{tpu_custom_call.1} parent=0 // pred_region
    _
  $region9: #{tpu_custom_call.1} parent=0 // pred_fallthru
    _
  // Predicated region
  $region10: #{tpu_custom_call.1} parent=0 // pred_check
    _
  $region11: #{tpu_custom_call.1} parent=0 // pred_check_branch
    %22 = sbr.rel (0) target = $region13
  $region12: #{tpu_custom_call.1} parent=0 // pred_region
    _
  $region13: #{tpu_custom_call.1} parent=0 // pred_fallthru
    _
  // Predicated region
  $region14: #{tpu_custom_call.1} parent=0 // pred_check
    _
  $region15: #{tpu_custom_call.1} parent=0 // pred_check_branch
    %24 = sbr.rel (0) target = $region17
  $region16: #{tpu_custom_call.1} parent=0 // pred_region
    _
  $region17: #{tpu_custom_call.1} parent=0 // pred_fallthru
    _
  // Predicated region
  $region18: #{tpu_custom_call.1} parent=0 // pred_check
    _
  $region19: #{tpu_custom_call.1} parent=0 // pred_check_branch
    %26 = sbr.rel (0) target = $region21
  $region20: #{tpu_custom_call.1} parent=0 // pred_region
    _
  $region21: #{tpu_custom_call.1} parent=0 // pred_fallthru
    _
  // Predicated region
  $region22: #{tpu_custom_call.1} parent=0 // pred_check
    _
  $region23: #{tpu_custom_call.1} parent=0 // pred_check_branch
    %28 = sbr.rel (0) target = $region25
  $region24: #{tpu_custom_call.1} parent=0 // pred_region
    _
  $region25: #{tpu_custom_call.1} parent=0 // pred_fallthru
    _
  // Predicated region
  $region26: #{tpu_custom_call.1} parent=0 // pred_check
    _
  $region27: #{tpu_custom_call.1} parent=0 // pred_check_branch
    %30 = sbr.rel (0) target = $region29
  $region28: #{tpu_custom_call.1} parent=0 // pred_region
    _
  $region29: #{tpu_custom_call.1} parent=0 // pred_fallthru
    _
  // Predicated region
  $region30: #{tpu_custom_call.1} parent=0 // pred_check
    _
  $region31: #{tpu_custom_call.1} parent=0 // pred_check_branch
    %32 = sbr.rel (0) target = $region33
  $region32: #{tpu_custom_call.1} parent=0 // pred_region
    _
  $region33: #{tpu_custom_call.1} parent=0 // pred_fallthru
    _
  %v34 = vld [vmem:[%s1] sm:$0xf]
  %v35 = vld [vmem:[%s1 + $0x4] sm:$0xf]
  %v36 = vld [vmem:[%s2] sm:$0xf]
  %v37 = vld [vmem:[%s2 + $0x4] sm:$0xf]
  %v38 = vld [vmem:[%s3] sm:$0x1]
  %v40 = vlaneseq
  %v41 = vshrl.u32 %v40, 7
  %v42 = vsub.s32 0, %v41
  %v43 = vrot.slane %v38, %v42
  %v47 = vunpack.c.l.b16 %v34
  %v48 = vunpack.c.l.b16 %v35
  %v49 = vpack.c.b16 %v48, %v47
  %v52 = vunpack.c.l.b16 %v36
  %v53 = vunpack.c.l.b16 %v37
  %v54 = vpack.c.b16 %v53, %v52
  %vm56 = vcmask 130048
  %v58 = vsel %vm56, %v49, 0
  %60 = vmatprep.subr.bf16.mxu0 0
  %61 = vmatpush1.bf16.msra.mxu0 %v54
  %62 = vmatprep.subr.bf16.mxu0 0
  %63 = vmatpush1.bf16.msra.mxu0 0
  %64 = vmatprep.subr.bf16.mxu0 0
  %65 = vmatpush1.bf16.msra.mxu0 0
  %66 = vmatprep.subr.bf16.mxu0 0
  %67 = vmatpush1.bf16.msra.mxu0 0
  %68 = vmatprep.subr.bf16.mxu0 0
  %69 = vmatpush1.bf16.msra.mxu0 0
  %70 = vmatprep.subr.bf16.mxu0 0
  %71 = vmatpush1.bf16.msra.mxu0 0
  %72 = vmatprep.subr.bf16.mxu0 0
  %73 = vmatpush1.bf16.msra.mxu0 0
  %74 = vmatprep.subr.bf16.mxu0 0
  %75 = vmatpush1.bf16.msra.mxu0 0
  %76 = vmatprep.subr.bf16.mxu0 0
  %77 = vmatpush1.bf16.msra.mxu0 0
  %78 = vmatprep.subr.bf16.mxu0 0
  %79 = vmatpush1.bf16.msra.mxu0 0
  %80 = vmatprep.subr.bf16.mxu0 0
  %81 = vmatpush1.bf16.msra.mxu0 0
  %82 = vmatprep.subr.bf16.mxu0 0
  %83 = vmatpush1.bf16.msra.mxu0 0
  %84 = vmatprep.subr.bf16.mxu0 0
  %85 = vmatpush1.bf16.msra.mxu0 0
  %86 = vmatprep.subr.bf16.mxu0 0
  %87 = vmatpush1.bf16.msra.mxu0 0
  %88 = vmatprep.subr.bf16.mxu0 0
  %89 = vmatpush1.bf16.msra.mxu0 0
  %90 = vmatprep.subr.bf16.mxu0 0
  %91 = vmatpush1.bf16.msra.mxu0 0
  %92 = vmatprep.mubr.bf16.mxu0 0
  %93 = vmatmul.mubr.bf16.gmra.mrb[0].mxu0 %v58
  %v94 = vpop.f32.mrb[0].mxu0
  %v95 = vadd.f32 %v43, %v94
  %v96 = vpop.f32.mrb[0].mxu0
  %v97 = vpop.f32.mrb[0].mxu0
  %v98 = vadd.f32 %v43, %v97
  %v99 = vpop.f32.mrb[0].mxu0
  %100 = vdwg.mxu0
  %v101 = vtanh.pop %v95
  %v102 = vtanh.pop %v98
  %v103 = vpack.c.bf16 %v102, %v101
  %v104 = vld [vmem:[%s4] sm:$0xf]
  %v105 = vld [vmem:[%s4 + $0x4] sm:$0xf]
  %v106 = vld [vmem:[%s4 + $0x8] sm:$0xf]
  %v107 = vld [vmem:[%s4 + $0xc] sm:$0xf]
  %v108 = vld [vmem:[%s5] sm:$0x1]
  %v110 = vlaneseq
  %v111 = vshrl.u32 %v110, 7
  %v112 = vsub.s32 0, %v111
  %v113 = vrot.slane %v108, %v112
  %v119 = vunpack.c.l.b16 %v104
  %v120 = vunpack.c.l.b16 %v105
  %v121 = vunpack.c.l.b16 %v106
  %v122 = vunpack.c.l.b16 %v107
  %v123 = vpack.c.b16 %v120, %v119
  %v124 = vpack.c.b16 %v122, %v121
  %vm127 = vcmask 261120
  %v129 = vsel %vm127, %v103, 0
  %131 = vmatprep.subr.bf16.mxu0 0
  %132 = vmatpush1.bf16.msra.mxu0 %v123
  %133 = vmatprep.subr.bf16.mxu0 0
  %134 = vmatpush1.bf16.msra.mxu0 %v124
  %135 = vmatprep.subr.bf16.mxu0 0
  %136 = vmatpush1.bf16.msra.mxu0 0
  %137 = vmatprep.subr.bf16.mxu0 0
  %138 = vmatpush1.bf16.msra.mxu0 0
  %139 = vmatprep.subr.bf16.mxu0 0
  %140 = vmatpush1.bf16.msra.mxu0 0
  %141 = vmatprep.subr.bf16.mxu0 0
  %142 = vmatpush1.bf16.msra.mxu0 0
  %143 = vmatprep.subr.bf16.mxu0 0
  %144 = vmatpush1.bf16.msra.mxu0 0
  %145 = vmatprep.subr.bf16.mxu0 0
  %146 = vmatpush1.bf16.msra.mxu0 0
  %147 = vmatprep.subr.bf16.mxu0 0
  %148 = vmatpush1.bf16.msra.mxu0 0
  %149 = vmatprep.subr.bf16.mxu0 0
  %150 = vmatpush1.bf16.msra.mxu0 0
  %151 = vmatprep.subr.bf16.mxu0 0
  %152 = vmatpush1.bf16.msra.mxu0 0
  %153 = vmatprep.subr.bf16.mxu0 0
  %154 = vmatpush1.bf16.msra.mxu0 0
  %155 = vmatprep.subr.bf16.mxu0 0
  %156 = vmatpush1.bf16.msra.mxu0 0
  %157 = vmatprep.subr.bf16.mxu0 0
  %158 = vmatpush1.bf16.msra.mxu0 0
  %159 = vmatprep.subr.bf16.mxu0 0
  %160 = vmatpush1.bf16.msra.mxu0 0
  %161 = vmatprep.subr.bf16.mxu0 0
  %162 = vmatpush1.bf16.msra.mxu0 0
  %163 = vmatprep.mubr.bf16.mxu0 0
  %164 = vmatmul.mubr.bf16.gmra.mrb[0].mxu0 %v129
  %v165 = vpop.f32.mrb[0].mxu0
  %v166 = vadd.f32 %v113, %v165
  %v167 = vpop.f32.mrb[0].mxu0
  %v168 = vpop.f32.mrb[0].mxu0
  %v169 = vadd.f32 %v113, %v168
  %v170 = vpop.f32.mrb[0].mxu0
  %171 = vdwg.mxu0
  %v172 = vld [vmem:[%s6] sm:$0xf]
  %v173 = vld [vmem:[%s6 + $0x4] sm:$0xf]
  %v174 = vld [vmem:[%s6 + $0x8] sm:$0xf]
  %v175 = vld [vmem:[%s6 + $0xc] sm:$0xf]
  %v176 = vld [vmem:[%s7] sm:$0x1]
  %v178 = vlaneseq
  %v179 = vshrl.u32 %v178, 7
  %v180 = vsub.s32 0, %v179
  %v181 = vrot.slane %v176, %v180
  %v187 = vunpack.c.l.b16 %v172
  %v188 = vunpack.c.l.b16 %v173
  %v189 = vunpack.c.l.b16 %v174
  %v190 = vunpack.c.l.b16 %v175
  %v191 = vpack.c.b16 %v188, %v187
  %v192 = vpack.c.b16 %v190, %v189
  %195 = vmatprep.subr.bf16.mxu0 0
  %196 = vmatpush1.bf16.msra.mxu0 %v191
  %197 = vmatprep.subr.bf16.mxu0 0
  %198 = vmatpush1.bf16.msra.mxu0 %v192
  %199 = vmatprep.subr.bf16.mxu0 0
  %200 = vmatpush1.bf16.msra.mxu0 0
  %201 = vmatprep.subr.bf16.mxu0 0
  %202 = vmatpush1.bf16.msra.mxu0 0
  %203 = vmatprep.subr.bf16.mxu0 0
  %204 = vmatpush1.bf16.msra.mxu0 0
  %205 = vmatprep.subr.bf16.mxu0 0
  %206 = vmatpush1.bf16.msra.mxu0 0
  %207 = vmatprep.subr.bf16.mxu0 0
  %208 = vmatpush1.bf16.msra.mxu0 0
  %209 = vmatprep.subr.bf16.mxu0 0
  %210 = vmatpush1.bf16.msra.mxu0 0
  %211 = vmatprep.subr.bf16.mxu0 0
  %212 = vmatpush1.bf16.msra.mxu0 0
  %213 = vmatprep.subr.bf16.mxu0 0
  %214 = vmatpush1.bf16.msra.mxu0 0
  %215 = vmatprep.subr.bf16.mxu0 0
  %216 = vmatpush1.bf16.msra.mxu0 0
  %217 = vmatprep.subr.bf16.mxu0 0
  %218 = vmatpush1.bf16.msra.mxu0 0
  %219 = vmatprep.subr.bf16.mxu0 0
  %220 = vmatpush1.bf16.msra.mxu0 0
  %221 = vmatprep.subr.bf16.mxu0 0
  %222 = vmatpush1.bf16.msra.mxu0 0
  %223 = vmatprep.subr.bf16.mxu0 0
  %224 = vmatpush1.bf16.msra.mxu0 0
  %225 = vmatprep.subr.bf16.mxu0 0
  %226 = vmatpush1.bf16.msra.mxu0 0
  %227 = vmatprep.mubr.bf16.mxu0 0
  %228 = vmatmul.mubr.bf16.gmra.mrb[0].mxu0 %v129
  %v229 = vpop.f32.mrb[0].mxu0
  %v230 = vadd.f32 %v181, %v229
  %v231 = vpop.f32.mrb[0].mxu0
  %v232 = vpop.f32.mrb[0].mxu0
  %v233 = vadd.f32 %v181, %v232
  %v234 = vpop.f32.mrb[0].mxu0
  %235 = vdwg.mxu0
  %v236 = vld [vmem:[#allocation2] sm:$0x1]
  %v237 = vmul.f32 %v236, 1.442695
  %v238 = vpow.pop %v237
  %v239 = vtanh.pop %v166
  %v240 = vtanh.pop %v169
  %v242 = vlaneseq
  %v243 = vshrl.u32 %v242, 7
  %v244 = vsub.s32 0, %v243
  %v245 = vrot.slane %v238, %v244
  %246 = vset.pattern.permute.xlu0 0
  %247 = vperm.xlu0 %246, %v245
  %v248 = vpop.permute.xlu0 %247
  %v250 = vmul.f32 %v248, %v239
  %v251 = vmul.f32 %v248, %v240
  %vm252 = vcmask 64512
  %253 = vst.msk [vmem:[%s8] sm:$0xff] %vm252, %v250
  %254 = vst.msk [vmem:[%s8 + $0x8] sm:$0xff] %vm252, %v251
  %255 = vst.msk [vmem:[%s9] sm:$0xff] %vm252, %v230
  %256 = vst.msk [vmem:[%s9 + $0x8] sm:$0xff] %vm252, %v233
  // Predicated region
  $region34: #{tpu_custom_call.1} parent=0 // pred_check
    _
  $region35: #{tpu_custom_call.1} parent=0 // pred_check_branch
    %258 = sbr.rel (0) target = $region37
  $region36: #{tpu_custom_call.1} parent=0 // pred_region
    _
  $region37: #{tpu_custom_call.1} parent=0 // pred_fallthru
    _
  // Predicated region
  $region38: #{tpu_custom_call.1} parent=0 // pred_check
    _
  $region39: #{tpu_custom_call.1} parent=0 // pred_check_branch
    %260 = sbr.rel (0) target = $region41
  $region40: #{tpu_custom_call.1} parent=0 // pred_region
    _
  $region41: #{tpu_custom_call.1} parent=0 // pred_fallthru
    _
  // Predicated region
  $region42: #{tpu_custom_call.1} parent=0 // pred_check
    _
  $region43: #{tpu_custom_call.1} parent=0 // pred_check_branch
    %262 = sbr.rel (0) target = $region45
  $region44: #{tpu_custom_call.1} parent=0 // pred_region
    _
  $region45: #{tpu_custom_call.1} parent=0 // pred_fallthru
    _
  // Predicated region
  $region46: #{tpu_custom_call.1} parent=0 // pred_check
    _
  $region47: #{tpu_custom_call.1} parent=0 // pred_check_branch
    %264 = sbr.rel (0) target = $region49
  $region48: #{tpu_custom_call.1} parent=0 // pred_region
    _
  $region49: #{tpu_custom_call.1} parent=0 // pred_fallthru
    _

</llo_original>
